<compile_context>
chip_gen: v7x
topology: tpu7x:2x2x1
jax: 0.10.0
libtpu: 0.0.40
codegen_flags: <defaults>
</compile_context>

<pallas_src>
import jax
import jax.numpy as jnp
from jax.experimental import pallas as pl
from jax.experimental.pallas import tpu as pltpu


def _mercer_tile_kernel(scale_ref, xi_ref, xj_ref, o_ref):
    # scale_ref: (bb, 1, 1) f32, holds -0.5 / sigma[b]
    # xi_ref:    (bb, tm, 1) row slice of x (sublane-major)
    # xj_ref:    (bb, 1,  N) column slice of x (lane-major)
    # o_ref:     (bb, tm, N) output tile (full rows -> contiguous writeback)
    d = jnp.abs(xi_ref[...] - xj_ref[...])            # broadcast, no transpose
    o_ref[...] = jnp.exp(d * scale_ref[...]).astype(o_ref.dtype)


def mercer_spd(x: jax.Array, *, out_dtype=None,
               target_tile_bytes: int = 4 << 20) -> jax.Array:
    """x: (B, N) -> (B, N, N) PSD Mercer kernel matrices."""
    B, N = x.shape
    out_dtype = x.dtype if out_dtype is None else out_dtype
    elem = jnp.dtype(out_dtype).itemsize

    # --- sigma per batch: exact O(N log N) closed form for mean |xi - xj| ---
    #   mean|xi - xj| = (2 / N^2) * sum_k (2k - N + 1) * x_(k)   (x sorted)
    # Centered per batch: weights sum to zero, so subtracting the mean is
    # mathematically identical but numerically well conditioned.
    xf = x.astype(jnp.float32)
    xc = xf - jnp.mean(xf, axis=-1, keepdims=True)
    xs = jnp.sort(xc, axis=-1)                                   # (B, N)
    w = 2.0 * jnp.arange(N, dtype=jnp.float32) - (N - 1)         # (N,)
    sigma = (2.0 / (N * N)) * jnp.sum(xs * w, axis=-1)           # (B,)
    # TODO(synk): sigma == 0 (all points identical) gives NaN, matching the
    # degenerate behavior of the PyTorch reference; clamp here if undesired.
    scale = (-0.5 / sigma).astype(jnp.float32).reshape(B, 1, 1)  # fold recip once

    # --- tile selection: full rows always (tn = N), ~target_tile_bytes tiles ---
    row_bytes = N * elem
    mat_bytes = N * row_bytes
    if mat_bytes >= target_tile_bytes:
        # Large N: tile over rows.  tm need not divide N (cdiv grid, masked
        # partial last tile), it only has to be sublane-aligned.
        bb = 1
        tm = max(8, (target_tile_bytes // row_bytes) // 8 * 8)
        if tm >= N:
            tm = N
    else:
        # Small N: one full matrix per batch element, tile over batch so each
        # grid step still writes ~target_tile_bytes.
        tm = N
        bb = int(min(B, max(1, target_tile_bytes // mat_bytes)))

    grid = (pl.cdiv(B, bb), pl.cdiv(N, tm))

    # --- explicit VMEM budget: double-buffered tiles + headroom, v7x-safe cap ---
    out_tile_bytes = bb * tm * N * elem
    in_tile_bytes = bb * (tm + N + 1) * 4
    vmem_limit = int(min(max(2 * (out_tile_bytes + in_tile_bytes) + (4 << 20),
                             32 << 20), 64 << 20))

    xi = x.reshape(B, N, 1)            # row operand, sublane-major
    xj = x.reshape(B, 1, N)            # column operand, lane-major

    return pl.pallas_call(
        _mercer_tile_kernel,
        out_shape=jax.ShapeDtypeStruct((B, N, N), out_dtype),
        grid_spec=pltpu.PrefetchScalarGridSpec(
            num_scalar_prefetch=0,
            grid=grid,
            in_specs=[
                pl.BlockSpec((bb, 1, 1), lambda b, i: (b, 0, 0)),    # -0.5/sigma
                pl.BlockSpec((bb, tm, 1), lambda b, i: (b, i, 0)),   # x rows
                pl.BlockSpec((bb, 1, N), lambda b, i: (b, 0, 0)),    # x cols
            ],
            out_specs=pl.BlockSpec((bb, tm, N), lambda b, i: (b, i, 0)),
        ),
        compiler_params=pltpu.CompilerParams(
            dimension_semantics=("parallel", "parallel"),
            vmem_limit_bytes=vmem_limit,
        ),
    )(scale, xi, xj)


def _mercer_spd_ref(x: jax.Array) -> jax.Array:
    """Pure-JAX reference mirroring the PyTorch MercerSPD."""
    d = jnp.abs(x[:, :, None] - x[:, None, :])
    sigma = jnp.mean(d, axis=(1, 2), keepdims=True)
    return jnp.exp(-0.5 * d / sigma)


if __name__ == "__main__":
    key = jax.random.PRNGKey(0)

    # --- main check: small demo shape, default (full-matrix-per-batch) tiles ---
    B, N = 2, 256
    x = jax.random.normal(key, (B, N), dtype=jnp.float32) + 10.0  # offset tests centering
    ref = _mercer_spd_ref(x)

    out = jax.block_until_ready(mercer_spd(x))
    assert out.shape == (B, N, N)
    assert jnp.allclose(out, ref, atol=1e-5, rtol=1e-5), "mismatch (default tiles)"

    # --- forced row tiling with a partial (masked) last tile: tm=96, grid=(2,3) ---
    out_t = jax.block_until_ready(mercer_spd(x, target_tile_bytes=96 << 10))
    assert jnp.allclose(out_t, ref, atol=1e-5, rtol=1e-5), "mismatch (row-tiled)"

    # --- N not a multiple of 128 (full-dim lane blocks, no padding/slicing) ---
    B2, N2 = 2, 200
    x2 = jax.random.normal(jax.random.PRNGKey(1), (B2, N2), dtype=jnp.float32)
    out2 = jax.block_until_ready(mercer_spd(x2))
    assert out2.shape == (B2, N2, N2)
    assert jnp.allclose(out2, _mercer_spd_ref(x2), atol=1e-5, rtol=1e-5), \
        "mismatch (N=200)"

    # --- bf16 output path (the ~2x HBM-write lever); values are in (0,1] ---
    out_bf16 = jax.block_until_ready(mercer_spd(x, out_dtype=jnp.bfloat16))
    assert out_bf16.dtype == jnp.bfloat16
    assert jnp.allclose(out_bf16.astype(jnp.float32), ref, atol=1e-2), \
        "mismatch (bf16 output)"

    print("KERNEL_OK")
</pallas_src>

<mosaic_0001>
module attributes {stable_mosaic.version = 11 : i64} {
  func.func @_mercer_tile_kernel(%arg0: i32, %arg1: i32, %arg2: memref<2x1x1xf32, #tpu.memory_space<vmem>>, %arg3: memref<2x256x1xf32, #tpu.memory_space<vmem>>, %arg4: memref<2x1x256xf32, #tpu.memory_space<vmem>>, %arg5: memref<2x256x256xf32, #tpu.memory_space<vmem>>) attributes {dimension_semantics = [#tpu.dimension_semantics<parallel>, #tpu.dimension_semantics<parallel>], iteration_bounds = array<i64: 1, 1>, scalar_prefetch = 0 : i64, scratch_operands = 0 : i64, tpu.core_type = #tpu.core_type<tc>, window_params = [{transform_indices = @transform_0, window_bounds = array<i64: 2, 1, 1>}, {transform_indices = @transform_1, window_bounds = array<i64: 2, 256, 1>}, {transform_indices = @transform_2, window_bounds = array<i64: 2, 1, 256>}, {transform_indices = @transform_3, window_bounds = array<i64: 2, 256, 256>}]} {
    %c0 = arith.constant 0 : index
    %c0_0 = arith.constant 0 : index
    %c0_1 = arith.constant 0 : index
    %0 = vector.load %arg3[%c0, %c0_0, %c0_1] : memref<2x256x1xf32, #tpu.memory_space<vmem>>, vector<2x256x1xf32>
    %c0_2 = arith.constant 0 : index
    %c0_3 = arith.constant 0 : index
    %c0_4 = arith.constant 0 : index
    %1 = vector.load %arg4[%c0_2, %c0_3, %c0_4] : memref<2x1x256xf32, #tpu.memory_space<vmem>>, vector<2x1x256xf32>
    %2 = vector.broadcast %0 : vector<2x256x1xf32> to vector<2x256x256xf32>
    %3 = vector.broadcast %1 : vector<2x1x256xf32> to vector<2x256x256xf32>
    %4 = arith.subf %2, %3 : vector<2x256x256xf32>
    %5 = math.absf %4 : vector<2x256x256xf32>
    %c0_5 = arith.constant 0 : index
    %c0_6 = arith.constant 0 : index
    %c0_7 = arith.constant 0 : index
    %6 = vector.load %arg2[%c0_5, %c0_6, %c0_7] : memref<2x1x1xf32, #tpu.memory_space<vmem>>, vector<2x1x1xf32>
    %7 = vector.broadcast %6 : vector<2x1x1xf32> to vector<2x256x256xf32>
    %8 = arith.mulf %5, %7 : vector<2x256x256xf32>
    %9 = math.exp %8 : vector<2x256x256xf32>
    %c0_8 = arith.constant 0 : index
    %c0_9 = arith.constant 0 : index
    %c0_10 = arith.constant 0 : index
    %10 = vector.load %arg5[%c0_8, %c0_9, %c0_10] : memref<2x256x256xf32, #tpu.memory_space<vmem>>, vector<2x256x256xf32>
    tpu.vector_store %arg5[%c0_8, %c0_9, %c0_10], %9 {strides = array<i32>} : memref<2x256x256xf32, #tpu.memory_space<vmem>>, vector<2x256x256xf32>,
    return
  }
  func.func @transform_0(%arg0: i32, %arg1: i32) -> (i32, i32, i32) {
    %c0_i32 = arith.constant 0 : i32
    %c0_i32_0 = arith.constant 0 : i32
    %c0_i32_1 = arith.constant 0 : i32
    return %arg0, %c0_i32, %c0_i32_0 : i32, i32, i32
  }
  func.func @transform_1(%arg0: i32, %arg1: i32) -> (i32, i32, i32) {
    %c0_i32 = arith.constant 0 : i32
    %c0_i32_0 = arith.constant 0 : i32
    return %arg0, %arg1, %c0_i32 : i32, i32, i32
  }
  func.func @transform_2(%arg0: i32, %arg1: i32) -> (i32, i32, i32) {
    %c0_i32 = arith.constant 0 : i32
    %c0_i32_0 = arith.constant 0 : i32
    %c0_i32_1 = arith.constant 0 : i32
    return %arg0, %c0_i32, %c0_i32_0 : i32, i32, i32
  }
  func.func @transform_3(%arg0: i32, %arg1: i32) -> (i32, i32, i32) {
    %c0_i32 = arith.constant 0 : i32
    %c0_i32_0 = arith.constant 0 : i32
    return %arg0, %arg1, %c0_i32 : i32, i32, i32
  }
}

</mosaic_0001>

<llo_original>
// kernel: tpu_custom_call.1
$region0: #{tpu_custom_call.1}
  #allocation0 [shape = 'u32[]', space=smem, size = 0x4, offset = 0x4, fixed_abs, tag = 'smem constant byte address 0x4 - core index']
  #allocation1 [shape = 'u32[144,128]{1,0:T(1,128)}', space=vmem, size = 0x12000, scoped, tag = 'internal scratch']
  %s0 = inlined_call_operand.vmem [shape: f32[2,1,1], index: 0, kind: input, shape index: {}]
  %s1 = inlined_call_operand.vmem [shape: f32[2,256,1], index: 1, kind: input, shape index: {}]
  %s2 = inlined_call_operand.vmem [shape: f32[2,1,256], index: 2, kind: input, shape index: {}]
  %s3 = inlined_call_operand.hbm [shape: f32[2,256,256], index: 3, kind: output, shape index: {}]
  %s4 = sld [smem:[#allocation0]]
  $region22: #{tpu_custom_call.1} parent=0
    _
  %s6 = ssub.s32 1, %s4
  %s7 = scalar_select 0, %s6, %s4
  $region1: #{tpu_custom_call.1} parent=0
    #allocation2 [shape = 'u8[524288]{0}', space=vmem, size = 0x80000, scoped, tag = 'output window, operand 0, single buffered']
    #allocation3 [shape = 's32[1]{0}', space=sflag, size = 0x4, scoped, tag = 'scoped memory for tpu_custom_call.1']
    %8 = vsyncpa [#allocation3], 0
    // Predicated region
    $region2: #{tpu_custom_call.1} parent=1 // pred_check
      _
    $region3: #{tpu_custom_call.1} parent=1 // pred_check_branch
      %10 = sbr.rel (0) target = $region5
    $region4: #{tpu_custom_call.1} parent=1 // pred_region
      _
    $region5: #{tpu_custom_call.1} parent=1 // pred_fallthru
      _
    // Predicated region
    $region6: #{tpu_custom_call.1} parent=1 // pred_check
      _
    $region7: #{tpu_custom_call.1} parent=1 // pred_check_branch
      %12 = sbr.rel (0) target = $region9
    $region8: #{tpu_custom_call.1} parent=1 // pred_region
      _
    $region9: #{tpu_custom_call.1} parent=1 // pred_fallthru
      _
    // Predicated region
    $region10: #{tpu_custom_call.1} parent=1 // pred_check
      _
    $region11: #{tpu_custom_call.1} parent=1 // pred_check_branch
      %14 = sbr.rel (0) target = $region13
    $region12: #{tpu_custom_call.1} parent=1 // pred_region
      _
    $region13: #{tpu_custom_call.1} parent=1 // pred_fallthru
      _
    %v15 = vld [vmem:[%s1] sm:$0xff]
    %v16 = vld [vmem:[%s1 + $0x8] sm:$0xff]
    %v17 = vld [vmem:[%s1 + $0x10] sm:$0xff]
    %v18 = vld [vmem:[%s1 + $0x18] sm:$0xff]
    %v19 = vld [vmem:[%s1 + $0x20] sm:$0xff]
    %v20 = vld [vmem:[%s1 + $0x28] sm:$0xff]
    %v21 = vld [vmem:[%s1 + $0x30] sm:$0xff]
    %v22 = vld [vmem:[%s1 + $0x38] sm:$0xff]
    %v23 = vld [vmem:[%s1 + $0x40] sm:$0xff]
    %v24 = vld [vmem:[%s1 + $0x48] sm:$0xff]
    %v25 = vld [vmem:[%s1 + $0x50] sm:$0xff]
    %v26 = vld [vmem:[%s1 + $0x58] sm:$0xff]
    %v27 = vld [vmem:[%s1 + $0x60] sm:$0xff]
    %v28 = vld [vmem:[%s1 + $0x68] sm:$0xff]
    %v29 = vld [vmem:[%s1 + $0x70] sm:$0xff]
    %v30 = vld [vmem:[%s1 + $0x78] sm:$0xff]
    %v31 = vld [vmem:[%s1 + $0x80] sm:$0xff]
    %v32 = vld [vmem:[%s1 + $0x88] sm:$0xff]
    %v33 = vld [vmem:[%s1 + $0x90] sm:$0xff]
    %v34 = vld [vmem:[%s1 + $0x98] sm:$0xff]
    %v35 = vld [vmem:[%s1 + $0xa0] sm:$0xff]
    %v36 = vld [vmem:[%s1 + $0xa8] sm:$0xff]
    %v37 = vld [vmem:[%s1 + $0xb0] sm:$0xff]
    %v38 = vld [vmem:[%s1 + $0xb8] sm:$0xff]
    %v39 = vld [vmem:[%s1 + $0xc0] sm:$0xff]
    %v40 = vld [vmem:[%s1 + $0xc8] sm:$0xff]
    %v41 = vld [vmem:[%s1 + $0xd0] sm:$0xff]
    %v42 = vld [vmem:[%s1 + $0xd8] sm:$0xff]
    %v43 = vld [vmem:[%s1 + $0xe0] sm:$0xff]
    %v44 = vld [vmem:[%s1 + $0xe8] sm:$0xff]
    %v45 = vld [vmem:[%s1 + $0xf0] sm:$0xff]
    %v46 = vld [vmem:[%s1 + $0xf8] sm:$0xff]
    %v47 = vld [vmem:[%s1 + $0x100] sm:$0xff]
    %v48 = vld [vmem:[%s1 + $0x108] sm:$0xff]
    %v49 = vld [vmem:[%s1 + $0x110] sm:$0xff]
    %v50 = vld [vmem:[%s1 + $0x118] sm:$0xff]
    %v51 = vld [vmem:[%s1 + $0x120] sm:$0xff]
    %v52 = vld [vmem:[%s1 + $0x128] sm:$0xff]
    %v53 = vld [vmem:[%s1 + $0x130] sm:$0xff]
    %v54 = vld [vmem:[%s1 + $0x138] sm:$0xff]
    %v55 = vld [vmem:[%s1 + $0x140] sm:$0xff]
    %v56 = vld [vmem:[%s1 + $0x148] sm:$0xff]
    %v57 = vld [vmem:[%s1 + $0x150] sm:$0xff]
    %v58 = vld [vmem:[%s1 + $0x158] sm:$0xff]
    %v59 = vld [vmem:[%s1 + $0x160] sm:$0xff]
    %v60 = vld [vmem:[%s1 + $0x168] sm:$0xff]
    %v61 = vld [vmem:[%s1 + $0x170] sm:$0xff]
    %v62 = vld [vmem:[%s1 + $0x178] sm:$0xff]
    %v63 = vld [vmem:[%s1 + $0x180] sm:$0xff]
    %v64 = vld [vmem:[%s1 + $0x188] sm:$0xff]
    %v65 = vld [vmem:[%s1 + $0x190] sm:$0xff]
    %v66 = vld [vmem:[%s1 + $0x198] sm:$0xff]
    %v67 = vld [vmem:[%s1 + $0x1a0] sm:$0xff]
    %v68 = vld [vmem:[%s1 + $0x1a8] sm:$0xff]
    %v69 = vld [vmem:[%s1 + $0x1b0] sm:$0xff]
    %v70 = vld [vmem:[%s1 + $0x1b8] sm:$0xff]
    %v71 = vld [vmem:[%s1 + $0x1c0] sm:$0xff]
    %v72 = vld [vmem:[%s1 + $0x1c8] sm:$0xff]
    %v73 = vld [vmem:[%s1 + $0x1d0] sm:$0xff]
    %v74 = vld [vmem:[%s1 + $0x1d8] sm:$0xff]
    %v75 = vld [vmem:[%s1 + $0x1e0] sm:$0xff]
    %v76 = vld [vmem:[%s1 + $0x1e8] sm:$0xff]
    %v77 = vld [vmem:[%s1 + $0x1f0] sm:$0xff]
    %v78 = vld [vmem:[%s1 + $0x1f8] sm:$0xff]
    %v79 = vld [vmem:[%s2] sm:$0x3]
    %v80 = vld [vmem:[%s2 + $0x2] sm:$0x3]
    %82 = vset.pattern.permute.xlu0 0
    %83 = vperm.xlu0 %82, %v15
    %v84 = vpop.permute.xlu0 %83
    %87 = vset.pattern.permute.xlu0 0
    %88 = vperm.xlu0 %87, %v16
    %v89 = vpop.permute.xlu0 %88
    %92 = vset.pattern.permute.xlu0 0
    %93 = vperm.xlu0 %92, %v17
    %v94 = vpop.permute.xlu0 %93
    %97 = vset.pattern.permute.xlu0 0
    %98 = vperm.xlu0 %97, %v18
    %v99 = vpop.permute.xlu0 %98
    %102 = vset.pattern.permute.xlu0 0
    %103 = vperm.xlu0 %102, %v19
    %v104 = vpop.permute.xlu0 %103
    %107 = vset.pattern.permute.xlu0 0
    %108 = vperm.xlu0 %107, %v20
    %v109 = vpop.permute.xlu0 %108
    %112 = vset.pattern.permute.xlu0 0
    %113 = vperm.xlu0 %112, %v21
    %v114 = vpop.permute.xlu0 %113
    %117 = vset.pattern.permute.xlu0 0
    %118 = vperm.xlu0 %117, %v22
    %v119 = vpop.permute.xlu0 %118
    %122 = vset.pattern.permute.xlu0 0
    %123 = vperm.xlu0 %122, %v23
    %v124 = vpop.permute.xlu0 %123
    %127 = vset.pattern.permute.xlu0 0
    %128 = vperm.xlu0 %127, %v24
    %v129 = vpop.permute.xlu0 %128
    %132 = vset.pattern.permute.xlu0 0
    %133 = vperm.xlu0 %132, %v25
    %v134 = vpop.permute.xlu0 %133
    %137 = vset.pattern.permute.xlu0 0
    %138 = vperm.xlu0 %137, %v26
    %v139 = vpop.permute.xlu0 %138
    %142 = vset.pattern.permute.xlu0 0
    %143 = vperm.xlu0 %142, %v27
    %v144 = vpop.permute.xlu0 %143
    %147 = vset.pattern.permute.xlu0 0
    %148 = vperm.xlu0 %147, %v28
    %v149 = vpop.permute.xlu0 %148
    %152 = vset.pattern.permute.xlu0 0
    %153 = vperm.xlu0 %152, %v29
    %v154 = vpop.permute.xlu0 %153
    %157 = vset.pattern.permute.xlu0 0
    %158 = vperm.xlu0 %157, %v30
    %v159 = vpop.permute.xlu0 %158
    %162 = vset.pattern.permute.xlu0 0
    %163 = vperm.xlu0 %162, %v31
    %v164 = vpop.permute.xlu0 %163
    %167 = vset.pattern.permute.xlu0 0
    %168 = vperm.xlu0 %167, %v32
    %v169 = vpop.permute.xlu0 %168
    %172 = vset.pattern.permute.xlu0 0
    %173 = vperm.xlu0 %172, %v33
    %v174 = vpop.permute.xlu0 %173
    %177 = vset.pattern.permute.xlu0 0
    %178 = vperm.xlu0 %177, %v34
    %v179 = vpop.permute.xlu0 %178
    %182 = vset.pattern.permute.xlu0 0
    %183 = vperm.xlu0 %182, %v35
    %v184 = vpop.permute.xlu0 %183
    %187 = vset.pattern.permute.xlu0 0
    %188 = vperm.xlu0 %187, %v36
    %v189 = vpop.permute.xlu0 %188
    %192 = vset.pattern.permute.xlu0 0
    %193 = vperm.xlu0 %192, %v37
    %v194 = vpop.permute.xlu0 %193
    %197 = vset.pattern.permute.xlu0 0
    %198 = vperm.xlu0 %197, %v38
    %v199 = vpop.permute.xlu0 %198
    %202 = vset.pattern.permute.xlu0 0
    %203 = vperm.xlu0 %202, %v39
    %v204 = vpop.permute.xlu0 %203
    %207 = vset.pattern.permute.xlu0 0
    %208 = vperm.xlu0 %207, %v40
    %v209 = vpop.permute.xlu0 %208
    %212 = vset.pattern.permute.xlu0 0
    %213 = vperm.xlu0 %212, %v41
    %v214 = vpop.permute.xlu0 %213
    %217 = vset.pattern.permute.xlu0 0
    %218 = vperm.xlu0 %217, %v42
    %v219 = vpop.permute.xlu0 %218
    %222 = vset.pattern.permute.xlu0 0
    %223 = vperm.xlu0 %222, %v43
    %v224 = vpop.permute.xlu0 %223
    %227 = vset.pattern.permute.xlu0 0
    %228 = vperm.xlu0 %227, %v44
    %v229 = vpop.permute.xlu0 %228
    %232 = vset.pattern.permute.xlu0 0
    %233 = vperm.xlu0 %232, %v45
    %v234 = vpop.permute.xlu0 %233
    %237 = vset.pattern.permute.xlu0 0
    %238 = vperm.xlu0 %237, %v46
    %v239 = vpop.permute.xlu0 %238
    %242 = vset.pattern.permute.xlu0 0
    %243 = vperm.xlu0 %242, %v47
    %v244 = vpop.permute.xlu0 %243
    %247 = vset.pattern.permute.xlu0 0
    %248 = vperm.xlu0 %247, %v48
    %v249 = vpop.permute.xlu0 %248
    %252 = vset.pattern.permute.xlu0 0
    %253 = vperm.xlu0 %252, %v49
    %v254 = vpop.permute.xlu0 %253
    %257 = vset.pattern.permute.xlu0 0
    %258 = vperm.xlu0 %257, %v50
    %v259 = vpop.permute.xlu0 %258
    %262 = vset.pattern.permute.xlu0 0
    %263 = vperm.xlu0 %262, %v51
    %v264 = vpop.permute.xlu0 %263
    %267 = vset.pattern.permute.xlu0 0
    %268 = vperm.xlu0 %267, %v52
    %v269 = vpop.permute.xlu0 %268
    %272 = vset.pattern.permute.xlu0 0
    %273 = vperm.xlu0 %272, %v53
    %v274 = vpop.permute.xlu0 %273
    %277 = vset.pattern.permute.xlu0 0
    %278 = vperm.xlu0 %277, %v54
    %v279 = vpop.permute.xlu0 %278
    %282 = vset.pattern.permute.xlu0 0
    %283 = vperm.xlu0 %282, %v55
    %v284 = vpop.permute.xlu0 %283
    %287 = vset.pattern.permute.xlu0 0
    %288 = vperm.xlu0 %287, %v56
    %v289 = vpop.permute.xlu0 %288
    %292 = vset.pattern.permute.xlu0 0
    %293 = vperm.xlu0 %292, %v57
    %v294 = vpop.permute.xlu0 %293
    %297 = vset.pattern.permute.xlu0 0
    %298 = vperm.xlu0 %297, %v58
    %v299 = vpop.permute.xlu0 %298
    %302 = vset.pattern.permute.xlu0 0
    %303 = vperm.xlu0 %302, %v59
    %v304 = vpop.permute.xlu0 %303
    %307 = vset.pattern.permute.xlu0 0
    %308 = vperm.xlu0 %307, %v60
    %v309 = vpop.permute.xlu0 %308
    %312 = vset.pattern.permute.xlu0 0
    %313 = vperm.xlu0 %312, %v61
    %v314 = vpop.permute.xlu0 %313
    %317 = vset.pattern.permute.xlu0 0
    %318 = vperm.xlu0 %317, %v62
    %v319 = vpop.permute.xlu0 %318
    %322 = vset.pattern.permute.xlu0 0
    %323 = vperm.xlu0 %322, %v63
    %v324 = vpop.permute.xlu0 %323
    %327 = vset.pattern.permute.xlu0 0
    %328 = vperm.xlu0 %327, %v64
    %v329 = vpop.permute.xlu0 %328
    %332 = vset.pattern.permute.xlu0 0
    %333 = vperm.xlu0 %332, %v65
    %v334 = vpop.permute.xlu0 %333
    %337 = vset.pattern.permute.xlu0 0
    %338 = vperm.xlu0 %337, %v66
    %v339 = vpop.permute.xlu0 %338
    %342 = vset.pattern.permute.xlu0 0
    %343 = vperm.xlu0 %342, %v67
    %v344 = vpop.permute.xlu0 %343
    %347 = vset.pattern.permute.xlu0 0
    %348 = vperm.xlu0 %347, %v68
    %v349 = vpop.permute.xlu0 %348
    %352 = vset.pattern.permute.xlu0 0
    %353 = vperm.xlu0 %352, %v69
    %v354 = vpop.permute.xlu0 %353
    %357 = vset.pattern.permute.xlu0 0
    %358 = vperm.xlu0 %357, %v70
    %v359 = vpop.permute.xlu0 %358
    %362 = vset.pattern.permute.xlu0 0
    %363 = vperm.xlu0 %362, %v71
    %v364 = vpop.permute.xlu0 %363
    %367 = vset.pattern.permute.xlu0 0
    %368 = vperm.xlu0 %367, %v72
    %v369 = vpop.permute.xlu0 %368
    %372 = vset.pattern.permute.xlu0 0
    %373 = vperm.xlu0 %372, %v73
    %v374 = vpop.permute.xlu0 %373
    %377 = vset.pattern.permute.xlu0 0
    %378 = vperm.xlu0 %377, %v74
    %v379 = vpop.permute.xlu0 %378
    %382 = vset.pattern.permute.xlu0 0
    %383 = vperm.xlu0 %382, %v75
    %v384 = vpop.permute.xlu0 %383
    %387 = vset.pattern.permute.xlu0 0
    %388 = vperm.xlu0 %387, %v76
    %v389 = vpop.permute.xlu0 %388
    %392 = vset.pattern.permute.xlu0 0
    %393 = vperm.xlu0 %392, %v77
    %v394 = vpop.permute.xlu0 %393
    %397 = vset.pattern.permute.xlu0 0
    %398 = vperm.xlu0 %397, %v78
    %v399 = vpop.permute.xlu0 %398
    %v403 = vlaneseq
    %v404 = vshrl.u32 %v403, 7
    %v405 = vsub.s32 0, %v404
    %v406 = vrot.slane %v79, %v405
    %v407 = vlaneseq
    %v408 = vshrl.u32 %v407, 7
    %v409 = vsub.s32 1, %v408
    %v410 = vrot.slane %v79, %v409
    %v411 = vlaneseq
    %v412 = vshrl.u32 %v411, 7
    %v413 = vsub.s32 0, %v412
    %v414 = vrot.slane %v80, %v413
    %v415 = vlaneseq
    %v416 = vshrl.u32 %v415, 7
    %v417 = vsub.s32 1, %v416
    %v418 = vrot.slane %v80, %v417
    %v423 = vsub.f32 %v84, %v406
    %v424 = vsub.f32 %v84, %v410
    %v425 = vsub.f32 %v89, %v406
    %v426 = vsub.f32 %v89, %v410
    %v427 = vsub.f32 %v94, %v406
    %v428 = vsub.f32 %v94, %v410
    %v429 = vsub.f32 %v99, %v406
    %v430 = vsub.f32 %v99, %v410
    %v431 = vsub.f32 %v104, %v406
    %v432 = vsub.f32 %v104, %v410
    %v433 = vsub.f32 %v109, %v406
    %v434 = vsub.f32 %v109, %v410
    %v435 = vsub.f32 %v114, %v406
    %v436 = vsub.f32 %v114, %v410
    %v437 = vsub.f32 %v119, %v406
    %v438 = vsub.f32 %v119, %v410
    %v439 = vsub.f32 %v124, %v406
    %v440 = vsub.f32 %v124, %v410
    %v441 = vsub.f32 %v129, %v406
    %v442 = vsub.f32 %v129, %v410
    %v443 = vsub.f32 %v134, %v406
    %v444 = vsub.f32 %v134, %v410
    %v445 = vsub.f32 %v139, %v406
    %v446 = vsub.f32 %v139, %v410
    %v447 = vsub.f32 %v144, %v406
    %v448 = vsub.f32 %v144, %v410
    %v449 = vsub.f32 %v149, %v406
    %v450 = vsub.f32 %v149, %v410
    %v451 = vsub.f32 %v154, %v406
    %v452 = vsub.f32 %v154, %v410
    %v453 = vsub.f32 %v159, %v406
    %v454 = vsub.f32 %v159, %v410
    %v455 = vsub.f32 %v164, %v406
    %v456 = vsub.f32 %v164, %v410
    %v457 = vsub.f32 %v169, %v406
    %v458 = vsub.f32 %v169, %v410
    %v459 = vsub.f32 %v174, %v406
    %v460 = vsub.f32 %v174, %v410
    %v461 = vsub.f32 %v179, %v406
    %v462 = vsub.f32 %v179, %v410
    %v463 = vsub.f32 %v184, %v406
    %v464 = vsub.f32 %v184, %v410
    %v465 = vsub.f32 %v189, %v406
    %v466 = vsub.f32 %v189, %v410
    %v467 = vsub.f32 %v194, %v406
    %v468 = vsub.f32 %v194, %v410
    %v469 = vsub.f32 %v199, %v406
    %v470 = vsub.f32 %v199, %v410
    %v471 = vsub.f32 %v204, %v406
    %v472 = vsub.f32 %v204, %v410
    %v473 = vsub.f32 %v209, %v406
    %v474 = vsub.f32 %v209, %v410
    %v475 = vsub.f32 %v214, %v406
    %v476 = vsub.f32 %v214, %v410
    %v477 = vsub.f32 %v219, %v406
    %v478 = vsub.f32 %v219, %v410
    %v479 = vsub.f32 %v224, %v406
    %v480 = vsub.f32 %v224, %v410
    %v481 = vsub.f32 %v229, %v406
    %v482 = vsub.f32 %v229, %v410
    %v483 = vsub.f32 %v234, %v406
    %v484 = vsub.f32 %v234, %v410
    %v485 = vsub.f32 %v239, %v406
    %v486 = vsub.f32 %v239, %v410
    %v487 = vsub.f32 %v244, %v414
    %v488 = vsub.f32 %v244, %v418
    %v489 = vsub.f32 %v249, %v414
    %v490 = vsub.f32 %v249, %v418
    %v491 = vsub.f32 %v254, %v414
    %v492 = vsub.f32 %v254, %v418
    %v493 = vsub.f32 %v259, %v414
    %v494 = vsub.f32 %v259, %v418
    %v495 = vsub.f32 %v264, %v414
    %v496 = vsub.f32 %v264, %v418
    %v497 = vsub.f32 %v269, %v414
    %v498 = vsub.f32 %v269, %v418
    %v499 = vsub.f32 %v274, %v414
    %v500 = vsub.f32 %v274, %v418
    %v501 = vsub.f32 %v279, %v414
    %v502 = vsub.f32 %v279, %v418
    %v503 = vsub.f32 %v284, %v414
    %v504 = vsub.f32 %v284, %v418
    %v505 = vsub.f32 %v289, %v414
    %v506 = vsub.f32 %v289, %v418
    %v507 = vsub.f32 %v294, %v414
    %v508 = vsub.f32 %v294, %v418
    %v509 = vsub.f32 %v299, %v414
    %v510 = vsub.f32 %v299, %v418
    %v511 = vsub.f32 %v304, %v414
    %v512 = vsub.f32 %v304, %v418
    %v513 = vsub.f32 %v309, %v414
    %v514 = vsub.f32 %v309, %v418
    %v515 = vsub.f32 %v314, %v414
    %v516 = vsub.f32 %v314, %v418
    %v517 = vsub.f32 %v319, %v414
    %v518 = vsub.f32 %v319, %v418
    %v519 = vsub.f32 %v324, %v414
    %v520 = vsub.f32 %v324, %v418
    %v521 = vsub.f32 %v329, %v414
    %v522 = vsub.f32 %v329, %v418
    %v523 = vsub.f32 %v334, %v414
    %v524 = vsub.f32 %v334, %v418
    %v525 = vsub.f32 %v339, %v414
    %v526 = vsub.f32 %v339, %v418
    %v527 = vsub.f32 %v344, %v414
    %v528 = vsub.f32 %v344, %v418
    %v529 = vsub.f32 %v349, %v414
    %v530 = vsub.f32 %v349, %v418
    %v531 = vsub.f32 %v354, %v414
    %v532 = vsub.f32 %v354, %v418
    %v533 = vsub.f32 %v359, %v414
    %v534 = vsub.f32 %v359, %v418
    %v535 = vsub.f32 %v364, %v414
    %v536 = vsub.f32 %v364, %v418
    %v537 = vsub.f32 %v369, %v414
    %v538 = vsub.f32 %v369, %v418
    %v539 = vsub.f32 %v374, %v414
    %v540 = vsub.f32 %v374, %v418
    %v541 = vsub.f32 %v379, %v414
    %v542 = vsub.f32 %v379, %v418
    %v543 = vsub.f32 %v384, %v414
    %v544 = vsub.f32 %v384, %v418
    %v545 = vsub.f32 %v389, %v414
    %v546 = vsub.f32 %v389, %v418
    %v547 = vsub.f32 %v394, %v414
    %v548 = vsub.f32 %v394, %v418
    %v549 = vsub.f32 %v399, %v414
    %v550 = vsub.f32 %v399, %v418
    %v551 = vand.u32 2147483647, %v423
    %v552 = vand.u32 2147483647, %v424
    %v553 = vand.u32 2147483647, %v425
    %v554 = vand.u32 2147483647, %v426
    %v555 = vand.u32 2147483647, %v427
    %v556 = vand.u32 2147483647, %v428
    %v557 = vand.u32 2147483647, %v429
    %v558 = vand.u32 2147483647, %v430
    %v559 = vand.u32 2147483647, %v431
    %v560 = vand.u32 2147483647, %v432
    %v561 = vand.u32 2147483647, %v433
    %v562 = vand.u32 2147483647, %v434
    %v563 = vand.u32 2147483647, %v435
    %v564 = vand.u32 2147483647, %v436
    %v565 = vand.u32 2147483647, %v437
    %v566 = vand.u32 2147483647, %v438
    %v567 = vand.u32 2147483647, %v439
    %v568 = vand.u32 2147483647, %v440
    %v569 = vand.u32 2147483647, %v441
    %v570 = vand.u32 2147483647, %v442
    %v571 = vand.u32 2147483647, %v443
    %v572 = vand.u32 2147483647, %v444
    %v573 = vand.u32 2147483647, %v445
    %v574 = vand.u32 2147483647, %v446
    %v575 = vand.u32 2147483647, %v447
    %v576 = vand.u32 2147483647, %v448
    %v577 = vand.u32 2147483647, %v449
    %v578 = vand.u32 2147483647, %v450
    %v579 = vand.u32 2147483647, %v451
    %v580 = vand.u32 2147483647, %v452
    %v581 = vand.u32 2147483647, %v453
    %v582 = vand.u32 2147483647, %v454
    %v583 = vand.u32 2147483647, %v455
    %v584 = vand.u32 2147483647, %v456
    %v585 = vand.u32 2147483647, %v457
    %v586 = vand.u32 2147483647, %v458
    %v587 = vand.u32 2147483647, %v459
    %v588 = vand.u32 2147483647, %v460
    %v589 = vand.u32 2147483647, %v461
    %v590 = vand.u32 2147483647, %v462
    %v591 = vand.u32 2147483647, %v463
    %v592 = vand.u32 2147483647, %v464
    %v593 = vand.u32 2147483647, %v465
    %v594 = vand.u32 2147483647, %v466
    %v595 = vand.u32 2147483647, %v467
    %v596 = vand.u32 2147483647, %v468
    %v597 = vand.u32 2147483647, %v469
    %v598 = vand.u32 2147483647, %v470
    %v599 = vand.u32 2147483647, %v471
    %v600 = vand.u32 2147483647, %v472
    %v601 = vand.u32 2147483647, %v473
    %v602 = vand.u32 2147483647, %v474
    %v603 = vand.u32 2147483647, %v475
    %v604 = vand.u32 2147483647, %v476
    %v605 = vand.u32 2147483647, %v477
    %v606 = vand.u32 2147483647, %v478
    %v607 = vand.u32 2147483647, %v479
    %v608 = vand.u32 2147483647, %v480
    %v609 = vand.u32 2147483647, %v481
    %v610 = vand.u32 2147483647, %v482
    %v611 = vand.u32 2147483647, %v483
    %v612 = vand.u32 2147483647, %v484
    %v613 = vand.u32 2147483647, %v485
    %v614 = vand.u32 2147483647, %v486
    %v615 = vand.u32 2147483647, %v487
    %v616 = vand.u32 2147483647, %v488
    %v617 = vand.u32 2147483647, %v489
    %v618 = vand.u32 2147483647, %v490
    %v619 = vand.u32 2147483647, %v491
    %v620 = vand.u32 2147483647, %v492
    %v621 = vand.u32 2147483647, %v493
    %v622 = vand.u32 2147483647, %v494
    %v623 = vand.u32 2147483647, %v495
    %v624 = vand.u32 2147483647, %v496
    %v625 = vand.u32 2147483647, %v497
    %v626 = vand.u32 2147483647, %v498
    %v627 = vand.u32 2147483647, %v499
    %v628 = vand.u32 2147483647, %v500
    %v629 = vand.u32 2147483647, %v501
    %v630 = vand.u32 2147483647, %v502
    %v631 = vand.u32 2147483647, %v503
    %v632 = vand.u32 2147483647, %v504
    %v633 = vand.u32 2147483647, %v505
    %v634 = vand.u32 2147483647, %v506
    %v635 = vand.u32 2147483647, %v507
    %v636 = vand.u32 2147483647, %v508
    %v637 = vand.u32 2147483647, %v509
    %v638 = vand.u32 2147483647, %v510
    %v639 = vand.u32 2147483647, %v511
    %v640 = vand.u32 2147483647, %v512
    %v641 = vand.u32 2147483647, %v513
    %v642 = vand.u32 2147483647, %v514
    %v643 = vand.u32 2147483647, %v515
    %v644 = vand.u32 2147483647, %v516
    %v645 = vand.u32 2147483647, %v517
    %v646 = vand.u32 2147483647, %v518
    %v647 = vand.u32 2147483647, %v519
    %v648 = vand.u32 2147483647, %v520
    %v649 = vand.u32 2147483647, %v521
    %v650 = vand.u32 2147483647, %v522
    %v651 = vand.u32 2147483647, %v523
    %v652 = vand.u32 2147483647, %v524
    %v653 = vand.u32 2147483647, %v525
    %v654 = vand.u32 2147483647, %v526
    %v655 = vand.u32 2147483647, %v527
    %v656 = vand.u32 2147483647, %v528
    %v657 = vand.u32 2147483647, %v529
    %v658 = vand.u32 2147483647, %v530
    %v659 = vand.u32 2147483647, %v531
    %v660 = vand.u32 2147483647, %v532
    %v661 = vand.u32 2147483647, %v533
    %v662 = vand.u32 2147483647, %v534
    %v663 = vand.u32 2147483647, %v535
    %v664 = vand.u32 2147483647, %v536
    %v665 = vand.u32 2147483647, %v537
    %v666 = vand.u32 2147483647, %v538
    %v667 = vand.u32 2147483647, %v539
    %v668 = vand.u32 2147483647, %v540
    %v669 = vand.u32 2147483647, %v541
    %v670 = vand.u32 2147483647, %v542
    %v671 = vand.u32 2147483647, %v543
    %v672 = vand.u32 2147483647, %v544
    %v673 = vand.u32 2147483647, %v545
    %v674 = vand.u32 2147483647, %v546
    %v675 = vand.u32 2147483647, %v547
    %v676 = vand.u32 2147483647, %v548
    %v677 = vand.u32 2147483647, %v549
    %v678 = vand.u32 2147483647, %v550
    %v679 = vld [vmem:[%s0] sm:$0x1]
    %v680 = vld [vmem:[%s0 + $0x1] sm:$0x1]
    %v683 = vlaneseq
    %v684 = vshrl.u32 %v683, 7
    %v685 = vsub.s32 0, %v684
    %v686 = vrot.slane %v679, %v685
    %v687 = vlaneseq
    %v688 = vshrl.u32 %v687, 7
    %v689 = vsub.s32 0, %v688
    %v690 = vrot.slane %v680, %v689
    %691 = vset.pattern.permute.xlu0 0
    %692 = vperm.xlu0 %691, %v686
    %v693 = vpop.permute.xlu0 %692
    %695 = vset.pattern.permute.xlu0 0
    %696 = vperm.xlu0 %695, %v690
    %v697 = vpop.permute.xlu0 %696
    %v699 = vmul.f32 %v551, %v693
    %v700 = vmul.f32 %v552, %v693
    %v701 = vmul.f32 %v553, %v693
    %v702 = vmul.f32 %v554, %v693
    %v703 = vmul.f32 %v555, %v693
    %v704 = vmul.f32 %v556, %v693
    %v705 = vmul.f32 %v557, %v693
    %v706 = vmul.f32 %v558, %v693
    %v707 = vmul.f32 %v559, %v693
    %v708 = vmul.f32 %v560, %v693
    %v709 = vmul.f32 %v561, %v693
    %v710 = vmul.f32 %v562, %v693
    %v711 = vmul.f32 %v563, %v693
    %v712 = vmul.f32 %v564, %v693
    %v713 = vmul.f32 %v565, %v693
    %v714 = vmul.f32 %v566, %v693
    %v715 = vmul.f32 %v567, %v693
    %v716 = vmul.f32 %v568, %v693
    %v717 = vmul.f32 %v569, %v693
    %v718 = vmul.f32 %v570, %v693
    %v719 = vmul.f32 %v571, %v693
    %v720 = vmul.f32 %v572, %v693
    %v721 = vmul.f32 %v573, %v693
    %v722 = vmul.f32 %v574, %v693
    %v723 = vmul.f32 %v575, %v693
    %v724 = vmul.f32 %v576, %v693
    %v725 = vmul.f32 %v577, %v693
    %v726 = vmul.f32 %v578, %v693
    %v727 = vmul.f32 %v579, %v693
    %v728 = vmul.f32 %v580, %v693
    %v729 = vmul.f32 %v581, %v693
    %v730 = vmul.f32 %v582, %v693
    %v731 = vmul.f32 %v583, %v693
    %v732 = vmul.f32 %v584, %v693
    %v733 = vmul.f32 %v585, %v693
    %v734 = vmul.f32 %v586, %v693
    %v735 = vmul.f32 %v587, %v693
    %v736 = vmul.f32 %v588, %v693
    %v737 = vmul.f32 %v589, %v693
    %v738 = vmul.f32 %v590, %v693
    %v739 = vmul.f32 %v591, %v693
    %v740 = vmul.f32 %v592, %v693
    %v741 = vmul.f32 %v593, %v693
    %v742 = vmul.f32 %v594, %v693
    %v743 = vmul.f32 %v595, %v693
    %v744 = vmul.f32 %v596, %v693
    %v745 = vmul.f32 %v597, %v693
    %v746 = vmul.f32 %v598, %v693
    %v747 = vmul.f32 %v599, %v693
    %v748 = vmul.f32 %v600, %v693
    %v749 = vmul.f32 %v601, %v693
    %v750 = vmul.f32 %v602, %v693
    %v751 = vmul.f32 %v603, %v693
    %v752 = vmul.f32 %v604, %v693
    %v753 = vmul.f32 %v605, %v693
    %v754 = vmul.f32 %v606, %v693
    %v755 = vmul.f32 %v607, %v693
    %v756 = vmul.f32 %v608, %v693
    %v757 = vmul.f32 %v609, %v693
    %v758 = vmul.f32 %v610, %v693
    %v759 = vmul.f32 %v611, %v693
    %v760 = vmul.f32 %v612, %v693
    %v761 = vmul.f32 %v613, %v693
    %v762 = vmul.f32 %v614, %v693
    %v763 = vmul.f32 %v615, %v697
    %v764 = vmul.f32 %v616, %v697
    %v765 = vmul.f32 %v617, %v697
    %v766 = vmul.f32 %v618, %v697
    %v767 = vmul.f32 %v619, %v697
    %v768 = vmul.f32 %v620, %v697
    %v769 = vmul.f32 %v621, %v697
    %v770 = vmul.f32 %v622, %v697
    %v771 = vmul.f32 %v623, %v697
    %v772 = vmul.f32 %v624, %v697
    %v773 = vmul.f32 %v625, %v697
    %v774 = vmul.f32 %v626, %v697
    %v775 = vmul.f32 %v627, %v697
    %v776 = vmul.f32 %v628, %v697
    %v777 = vmul.f32 %v629, %v697
    %v778 = vmul.f32 %v630, %v697
    %v779 = vmul.f32 %v631, %v697
    %v780 = vmul.f32 %v632, %v697
    %v781 = vmul.f32 %v633, %v697
    %v782 = vmul.f32 %v634, %v697
    %v783 = vmul.f32 %v635, %v697
    %v784 = vmul.f32 %v636, %v697
    %v785 = vmul.f32 %v637, %v697
    %v786 = vmul.f32 %v638, %v697
    %v787 = vmul.f32 %v639, %v697
    %v788 = vmul.f32 %v640, %v697
    %v789 = vmul.f32 %v641, %v697
    %v790 = vmul.f32 %v642, %v697
    %v791 = vmul.f32 %v643, %v697
    %v792 = vmul.f32 %v644, %v697
    %v793 = vmul.f32 %v645, %v697
    %v794 = vmul.f32 %v646, %v697
    %v795 = vmul.f32 %v647, %v697
    %v796 = vmul.f32 %v648, %v697
    %v797 = vmul.f32 %v649, %v697
    %v798 = vmul.f32 %v650, %v697
    %v799 = vmul.f32 %v651, %v697
    %v800 = vmul.f32 %v652, %v697
    %v801 = vmul.f32 %v653, %v697
    %v802 = vmul.f32 %v654, %v697
    %v803 = vmul.f32 %v655, %v697
    %v804 = vmul.f32 %v656, %v697
    %v805 = vmul.f32 %v657, %v697
    %v806 = vmul.f32 %v658, %v697
    %v807 = vmul.f32 %v659, %v697
    %v808 = vmul.f32 %v660, %v697
    %v809 = vmul.f32 %v661, %v697
    %v810 = vmul.f32 %v662, %v697
    %v811 = vmul.f32 %v663, %v697
    %v812 = vmul.f32 %v664, %v697
    %v813 = vmul.f32 %v665, %v697
    %v814 = vmul.f32 %v666, %v697
    %v815 = vmul.f32 %v667, %v697
    %v816 = vmul.f32 %v668, %v697
    %v817 = vmul.f32 %v669, %v697
    %v818 = vmul.f32 %v670, %v697
    %v819 = vmul.f32 %v671, %v697
    %v820 = vmul.f32 %v672, %v697
    %v821 = vmul.f32 %v673, %v697
    %v822 = vmul.f32 %v674, %v697
    %v823 = vmul.f32 %v675, %v697
    %v824 = vmul.f32 %v676, %v697
    %v825 = vmul.f32 %v677, %v697
    %v826 = vmul.f32 %v678, %v697
    %v827 = vmul.f32 %v699, 1.442695
    %v828 = vpow.pop %v827
    %v829 = vmul.f32 %v700, 1.442695
    %v830 = vpow.pop %v829
    %v831 = vmul.f32 %v701, 1.442695
    %v832 = vpow.pop %v831
    %v833 = vmul.f32 %v702, 1.442695
    %v834 = vpow.pop %v833
    %v835 = vmul.f32 %v703, 1.442695
    %v836 = vpow.pop %v835
    %v837 = vmul.f32 %v704, 1.442695
    %v838 = vpow.pop %v837
    %v839 = vmul.f32 %v705, 1.442695
    %v840 = vpow.pop %v839
    %v841 = vmul.f32 %v706, 1.442695
    %v842 = vpow.pop %v841
    %v843 = vmul.f32 %v707, 1.442695
    %v844 = vpow.pop %v843
    %v845 = vmul.f32 %v708, 1.442695
    %v846 = vpow.pop %v845
    %v847 = vmul.f32 %v709, 1.442695
    %v848 = vpow.pop %v847
    %v849 = vmul.f32 %v710, 1.442695
    %v850 = vpow.pop %v849
    %v851 = vmul.f32 %v711, 1.442695
    %v852 = vpow.pop %v851
    %v853 = vmul.f32 %v712, 1.442695
    %v854 = vpow.pop %v853
    %v855 = vmul.f32 %v713, 1.442695
    %v856 = vpow.pop %v855
    %v857 = vmul.f32 %v714, 1.442695
    %v858 = vpow.pop %v857
    %v859 = vmul.f32 %v715, 1.442695
    %v860 = vpow.pop %v859
    %v861 = vmul.f32 %v716, 1.442695
    %v862 = vpow.pop %v861
    %v863 = vmul.f32 %v717, 1.442695
    %v864 = vpow.pop %v863
    %v865 = vmul.f32 %v718, 1.442695
    %v866 = vpow.pop %v865
    %v867 = vmul.f32 %v719, 1.442695
    %v868 = vpow.pop %v867
    %v869 = vmul.f32 %v720, 1.442695
    %v870 = vpow.pop %v869
    %v871 = vmul.f32 %v721, 1.442695
    %v872 = vpow.pop %v871
    %v873 = vmul.f32 %v722, 1.442695
    %v874 = vpow.pop %v873
    %v875 = vmul.f32 %v723, 1.442695
    %v876 = vpow.pop %v875
    %v877 = vmul.f32 %v724, 1.442695
    %v878 = vpow.pop %v877
    %v879 = vmul.f32 %v725, 1.442695
    %v880 = vpow.pop %v879
    %v881 = vmul.f32 %v726, 1.442695
    %v882 = vpow.pop %v881
    %v883 = vmul.f32 %v727, 1.442695
    %v884 = vpow.pop %v883
    %v885 = vmul.f32 %v728, 1.442695
    %v886 = vpow.pop %v885
    %v887 = vmul.f32 %v729, 1.442695
    %v888 = vpow.pop %v887
    %v889 = vmul.f32 %v730, 1.442695
    %v890 = vpow.pop %v889
    %v891 = vmul.f32 %v731, 1.442695
    %v892 = vpow.pop %v891
    %v893 = vmul.f32 %v732, 1.442695
    %v894 = vpow.pop %v893
    %v895 = vmul.f32 %v733, 1.442695
    %v896 = vpow.pop %v895
    %v897 = vmul.f32 %v734, 1.442695
    %v898 = vpow.pop %v897
    %v899 = vmul.f32 %v735, 1.442695
    %v900 = vpow.pop %v899
    %v901 = vmul.f32 %v736, 1.442695
    %v902 = vpow.pop %v901
    %v903 = vmul.f32 %v737, 1.442695
    %v904 = vpow.pop %v903
    %v905 = vmul.f32 %v738, 1.442695
    %v906 = vpow.pop %v905
    %v907 = vmul.f32 %v739, 1.442695
    %v908 = vpow.pop %v907
    %v909 = vmul.f32 %v740, 1.442695
    %v910 = vpow.pop %v909
    %v911 = vmul.f32 %v741, 1.442695
    %v912 = vpow.pop %v911
    %v913 = vmul.f32 %v742, 1.442695
    %v914 = vpow.pop %v913
    %v915 = vmul.f32 %v743, 1.442695
    %v916 = vpow.pop %v915
    %v917 = vmul.f32 %v744, 1.442695
    %v918 = vpow.pop %v917
    %v919 = vmul.f32 %v745, 1.442695
    %v920 = vpow.pop %v919
    %v921 = vmul.f32 %v746, 1.442695
    %v922 = vpow.pop %v921
    %v923 = vmul.f32 %v747, 1.442695
    %v924 = vpow.pop %v923
    %v925 = vmul.f32 %v748, 1.442695
    %v926 = vpow.pop %v925
    %v927 = vmul.f32 %v749, 1.442695
    %v928 = vpow.pop %v927
    %v929 = vmul.f32 %v750, 1.442695
    %v930 = vpow.pop %v929
    %v931 = vmul.f32 %v751, 1.442695
    %v932 = vpow.pop %v931
    %v933 = vmul.f32 %v752, 1.442695
    %v934 = vpow.pop %v933
    %v935 = vmul.f32 %v753, 1.442695
    %v936 = vpow.pop %v935
    %v937 = vmul.f32 %v754, 1.442695
    %v938 = vpow.pop %v937
    %v939 = vmul.f32 %v755, 1.442695
    %v940 = vpow.pop %v939
    %v941 = vmul.f32 %v756, 1.442695
    %v942 = vpow.pop %v941
    %v943 = vmul.f32 %v757, 1.442695
    %v944 = vpow.pop %v943
    %v945 = vmul.f32 %v758, 1.442695
    %v946 = vpow.pop %v945
    %v947 = vmul.f32 %v759, 1.442695
    %v948 = vpow.pop %v947
    %v949 = vmul.f32 %v760, 1.442695
    %v950 = vpow.pop %v949
    %v951 = vmul.f32 %v761, 1.442695
    %v952 = vpow.pop %v951
    %v953 = vmul.f32 %v762, 1.442695
    %v954 = vpow.pop %v953
    %v955 = vmul.f32 %v763, 1.442695
    %v956 = vpow.pop %v955
    %v957 = vmul.f32 %v764, 1.442695
    %v958 = vpow.pop %v957
    %v959 = vmul.f32 %v765, 1.442695
    %v960 = vpow.pop %v959
    %v961 = vmul.f32 %v766, 1.442695
    %v962 = vpow.pop %v961
    %v963 = vmul.f32 %v767, 1.442695
    %v964 = vpow.pop %v963
    %v965 = vmul.f32 %v768, 1.442695
    %v966 = vpow.pop %v965
    %v967 = vmul.f32 %v769, 1.442695
    %v968 = vpow.pop %v967
    %v969 = vmul.f32 %v770, 1.442695
    %v970 = vpow.pop %v969
    %v971 = vmul.f32 %v771, 1.442695
    %v972 = vpow.pop %v971
    %v973 = vmul.f32 %v772, 1.442695
    %v974 = vpow.pop %v973
    %v975 = vmul.f32 %v773, 1.442695
    %v976 = vpow.pop %v975
    %v977 = vmul.f32 %v774, 1.442695
    %v978 = vpow.pop %v977
    %v979 = vmul.f32 %v775, 1.442695
    %v980 = vpow.pop %v979
    %v981 = vmul.f32 %v776, 1.442695
    %v982 = vpow.pop %v981
    %v983 = vmul.f32 %v777, 1.442695
    %v984 = vpow.pop %v983
    %v985 = vmul.f32 %v778, 1.442695
    %v986 = vpow.pop %v985
    %v987 = vmul.f32 %v779, 1.442695
    %v988 = vpow.pop %v987
    %v989 = vmul.f32 %v780, 1.442695
    %v990 = vpow.pop %v989
    %v991 = vmul.f32 %v781, 1.442695
    %v992 = vpow.pop %v991
    %v993 = vmul.f32 %v782, 1.442695
    %v994 = vpow.pop %v993
    %v995 = vmul.f32 %v783, 1.442695
    %v996 = vpow.pop %v995
    %v997 = vmul.f32 %v784, 1.442695
    %v998 = vpow.pop %v997
    %v999 = vmul.f32 %v785, 1.442695
    %v1000 = vpow.pop %v999
    %v1001 = vmul.f32 %v786, 1.442695
    %v1002 = vpow.pop %v1001
    %v1003 = vmul.f32 %v787, 1.442695
    %v1004 = vpow.pop %v1003
    %v1005 = vmul.f32 %v788, 1.442695
    %v1006 = vpow.pop %v1005
    %v1007 = vmul.f32 %v789, 1.442695
    %v1008 = vpow.pop %v1007
    %v1009 = vmul.f32 %v790, 1.442695
    %v1010 = vpow.pop %v1009
    %v1011 = vmul.f32 %v791, 1.442695
    %v1012 = vpow.pop %v1011
    %v1013 = vmul.f32 %v792, 1.442695
    %v1014 = vpow.pop %v1013
    %v1015 = vmul.f32 %v793, 1.442695
    %v1016 = vpow.pop %v1015
    %v1017 = vmul.f32 %v794, 1.442695
    %v1018 = vpow.pop %v1017
    %v1019 = vmul.f32 %v795, 1.442695
    %v1020 = vpow.pop %v1019
    %v1021 = vmul.f32 %v796, 1.442695
    %v1022 = vpow.pop %v1021
    %v1023 = vmul.f32 %v797, 1.442695
    %v1024 = vpow.pop %v1023
    %v1025 = vmul.f32 %v798, 1.442695
    %v1026 = vpow.pop %v1025
    %v1027 = vmul.f32 %v799, 1.442695
    %v1028 = vpow.pop %v1027
    %v1029 = vmul.f32 %v800, 1.442695
    %v1030 = vpow.pop %v1029
    %v1031 = vmul.f32 %v801, 1.442695
    %v1032 = vpow.pop %v1031
    %v1033 = vmul.f32 %v802, 1.442695
    %v1034 = vpow.pop %v1033
    %v1035 = vmul.f32 %v803, 1.442695
    %v1036 = vpow.pop %v1035
    %v1037 = vmul.f32 %v804, 1.442695
    %v1038 = vpow.pop %v1037
    %v1039 = vmul.f32 %v805, 1.442695
    %v1040 = vpow.pop %v1039
    %v1041 = vmul.f32 %v806, 1.442695
    %v1042 = vpow.pop %v1041
    %v1043 = vmul.f32 %v807, 1.442695
    %v1044 = vpow.pop %v1043
    %v1045 = vmul.f32 %v808, 1.442695
    %v1046 = vpow.pop %v1045
    %v1047 = vmul.f32 %v809, 1.442695
    %v1048 = vpow.pop %v1047
    %v1049 = vmul.f32 %v810, 1.442695
    %v1050 = vpow.pop %v1049
    %v1051 = vmul.f32 %v811, 1.442695
    %v1052 = vpow.pop %v1051
    %v1053 = vmul.f32 %v812, 1.442695
    %v1054 = vpow.pop %v1053
    %v1055 = vmul.f32 %v813, 1.442695
    %v1056 = vpow.pop %v1055
    %v1057 = vmul.f32 %v814, 1.442695
    %v1058 = vpow.pop %v1057
    %v1059 = vmul.f32 %v815, 1.442695
    %v1060 = vpow.pop %v1059
    %v1061 = vmul.f32 %v816, 1.442695
    %v1062 = vpow.pop %v1061
    %v1063 = vmul.f32 %v817, 1.442695
    %v1064 = vpow.pop %v1063
    %v1065 = vmul.f32 %v818, 1.442695
    %v1066 = vpow.pop %v1065
    %v1067 = vmul.f32 %v819, 1.442695
    %v1068 = vpow.pop %v1067
    %v1069 = vmul.f32 %v820, 1.442695
    %v1070 = vpow.pop %v1069
    %v1071 = vmul.f32 %v821, 1.442695
    %v1072 = vpow.pop %v1071
    %v1073 = vmul.f32 %v822, 1.442695
    %v1074 = vpow.pop %v1073
    %v1075 = vmul.f32 %v823, 1.442695
    %v1076 = vpow.pop %v1075
    %v1077 = vmul.f32 %v824, 1.442695
    %v1078 = vpow.pop %v1077
    %v1079 = vmul.f32 %v825, 1.442695
    %v1080 = vpow.pop %v1079
    %v1081 = vmul.f32 %v826, 1.442695
    %v1082 = vpow.pop %v1081
    %1083 = vst [vmem:[#allocation2] sm:$0xff] %v828
    %1084 = vst [vmem:[#allocation2 + $0x8] sm:$0xff] %v830
    %1085 = vst [vmem:[#allocation2 + $0x10] sm:$0xff] %v832
    %1086 = vst [vmem:[#allocation2 + $0x18] sm:$0xff] %v834
    %1087 = vst [vmem:[#allocation2 + $0x20] sm:$0xff] %v836
    %1088 = vst [vmem:[#allocation2 + $0x28] sm:$0xff] %v838
    %1089 = vst [vmem:[#allocation2 + $0x30] sm:$0xff] %v840
    %1090 = vst [vmem:[#allocation2 + $0x38] sm:$0xff] %v842
    %1091 = vst [vmem:[#allocation2 + $0x40] sm:$0xff] %v844
    %1092 = vst [vmem:[#allocation2 + $0x48] sm:$0xff] %v846
    %1093 = vst [vmem:[#allocation2 + $0x50] sm:$0xff] %v848
    %1094 = vst [vmem:[#allocation2 + $0x58] sm:$0xff] %v850
    %1095 = vst [vmem:[#allocation2 + $0x60] sm:$0xff] %v852
    %1096 = vst [vmem:[#allocation2 + $0x68] sm:$0xff] %v854
    %1097 = vst [vmem:[#allocation2 + $0x70] sm:$0xff] %v856
    %1098 = vst [vmem:[#allocation2 + $0x78] sm:$0xff] %v858
    %1099 = vst [vmem:[#allocation2 + $0x80] sm:$0xff] %v860
    %1100 = vst [vmem:[#allocation2 + $0x88] sm:$0xff] %v862
    %1101 = vst [vmem:[#allocation2 + $0x90] sm:$0xff] %v864
    %1102 = vst [vmem:[#allocation2 + $0x98] sm:$0xff] %v866
    %1103 = vst [vmem:[#allocation2 + $0xa0] sm:$0xff] %v868
    %1104 = vst [vmem:[#allocation2 + $0xa8] sm:$0xff] %v870
    %1105 = vst [vmem:[#allocation2 + $0xb0] sm:$0xff] %v872
    %1106 = vst [vmem:[#allocation2 + $0xb8] sm:$0xff] %v874
    %1107 = vst [vmem:[#allocation2 + $0xc0] sm:$0xff] %v876
    %1108 = vst [vmem:[#allocation2 + $0xc8] sm:$0xff] %v878
    %1109 = vst [vmem:[#allocation2 + $0xd0] sm:$0xff] %v880
    %1110 = vst [vmem:[#allocation2 + $0xd8] sm:$0xff] %v882
    %1111 = vst [vmem:[#allocation2 + $0xe0] sm:$0xff] %v884
    %1112 = vst [vmem:[#allocation2 + $0xe8] sm:$0xff] %v886
    %1113 = vst [vmem:[#allocation2 + $0xf0] sm:$0xff] %v888
    %1114 = vst [vmem:[#allocation2 + $0xf8] sm:$0xff] %v890
    %1115 = vst [vmem:[#allocation2 + $0x100] sm:$0xff] %v892
    %1116 = vst [vmem:[#allocation2 + $0x108] sm:$0xff] %v894
    %1117 = vst [vmem:[#allocation2 + $0x110] sm:$0xff] %v896
    %1118 = vst [vmem:[#allocation2 + $0x118] sm:$0xff] %v898
    %1119 = vst [vmem:[#allocation2 + $0x120] sm:$0xff] %v900
    %1120 = vst [vmem:[#allocation2 + $0x128] sm:$0xff] %v902
    %1121 = vst [vmem:[#allocation2 + $0x130] sm:$0xff] %v904
    %1122 = vst [vmem:[#allocation2 + $0x138] sm:$0xff] %v906
    %1123 = vst [vmem:[#allocation2 + $0x140] sm:$0xff] %v908
    %1124 = vst [vmem:[#allocation2 + $0x148] sm:$0xff] %v910
    %1125 = vst [vmem:[#allocation2 + $0x150] sm:$0xff] %v912
    %1126 = vst [vmem:[#allocation2 + $0x158] sm:$0xff] %v914
    %1127 = vst [vmem:[#allocation2 + $0x160] sm:$0xff] %v916
    %1128 = vst [vmem:[#allocation2 + $0x168] sm:$0xff] %v918
    %1129 = vst [vmem:[#allocation2 + $0x170] sm:$0xff] %v920
    %1130 = vst [vmem:[#allocation2 + $0x178] sm:$0xff] %v922
    %1131 = vst [vmem:[#allocation2 + $0x180] sm:$0xff] %v924
    %1132 = vst [vmem:[#allocation2 + $0x188] sm:$0xff] %v926
    %1133 = vst [vmem:[#allocation2 + $0x190] sm:$0xff] %v928
    %1134 = vst [vmem:[#allocation2 + $0x198] sm:$0xff] %v930
    %1135 = vst [vmem:[#allocation2 + $0x1a0] sm:$0xff] %v932
    %1136 = vst [vmem:[#allocation2 + $0x1a8] sm:$0xff] %v934
    %1137 = vst [vmem:[#allocation2 + $0x1b0] sm:$0xff] %v936
    %1138 = vst [vmem:[#allocation2 + $0x1b8] sm:$0xff] %v938
    %1139 = vst [vmem:[#allocation2 + $0x1c0] sm:$0xff] %v940
    %1140 = vst [vmem:[#allocation2 + $0x1c8] sm:$0xff] %v942
    %1141 = vst [vmem:[#allocation2 + $0x1d0] sm:$0xff] %v944
    %1142 = vst [vmem:[#allocation2 + $0x1d8] sm:$0xff] %v946
    %1143 = vst [vmem:[#allocation2 + $0x1e0] sm:$0xff] %v948
    %1144 = vst [vmem:[#allocation2 + $0x1e8] sm:$0xff] %v950
    %1145 = vst [vmem:[#allocation2 + $0x1f0] sm:$0xff] %v952
    %1146 = vst [vmem:[#allocation2 + $0x1f8] sm:$0xff] %v954
    %1147 = vst [vmem:[#allocation2 + $0x200] sm:$0xff] %v956
    %1148 = vst [vmem:[#allocation2 + $0x208] sm:$0xff] %v958
    %1149 = vst [vmem:[#allocation2 + $0x210] sm:$0xff] %v960
    %1150 = vst [vmem:[#allocation2 + $0x218] sm:$0xff] %v962
    %1151 = vst [vmem:[#allocation2 + $0x220] sm:$0xff] %v964
    %1152 = vst [vmem:[#allocation2 + $0x228] sm:$0xff] %v966
    %1153 = vst [vmem:[#allocation2 + $0x230] sm:$0xff] %v968
    %1154 = vst [vmem:[#allocation2 + $0x238] sm:$0xff] %v970
    %1155 = vst [vmem:[#allocation2 + $0x240] sm:$0xff] %v972
    %1156 = vst [vmem:[#allocation2 + $0x248] sm:$0xff] %v974
    %1157 = vst [vmem:[#allocation2 + $0x250] sm:$0xff] %v976
    %1158 = vst [vmem:[#allocation2 + $0x258] sm:$0xff] %v978
    %1159 = vst [vmem:[#allocation2 + $0x260] sm:$0xff] %v980
    %1160 = vst [vmem:[#allocation2 + $0x268] sm:$0xff] %v982
    %1161 = vst [vmem:[#allocation2 + $0x270] sm:$0xff] %v984
    %1162 = vst [vmem:[#allocation2 + $0x278] sm:$0xff] %v986
    %1163 = vst [vmem:[#allocation2 + $0x280] sm:$0xff] %v988
    %1164 = vst [vmem:[#allocation2 + $0x288] sm:$0xff] %v990
    %1165 = vst [vmem:[#allocation2 + $0x290] sm:$0xff] %v992
    %1166 = vst [vmem:[#allocation2 + $0x298] sm:$0xff] %v994
    %1167 = vst [vmem:[#allocation2 + $0x2a0] sm:$0xff] %v996
    %1168 = vst [vmem:[#allocation2 + $0x2a8] sm:$0xff] %v998
    %1169 = vst [vmem:[#allocation2 + $0x2b0] sm:$0xff] %v1000
    %1170 = vst [vmem:[#allocation2 + $0x2b8] sm:$0xff] %v1002
    %1171 = vst [vmem:[#allocation2 + $0x2c0] sm:$0xff] %v1004
    %1172 = vst [vmem:[#allocation2 + $0x2c8] sm:$0xff] %v1006
    %1173 = vst [vmem:[#allocation2 + $0x2d0] sm:$0xff] %v1008
    %1174 = vst [vmem:[#allocation2 + $0x2d8] sm:$0xff] %v1010
    %1175 = vst [vmem:[#allocation2 + $0x2e0] sm:$0xff] %v1012
    %1176 = vst [vmem:[#allocation2 + $0x2e8] sm:$0xff] %v1014
    %1177 = vst [vmem:[#allocation2 + $0x2f0] sm:$0xff] %v1016
    %1178 = vst [vmem:[#allocation2 + $0x2f8] sm:$0xff] %v1018
    %1179 = vst [vmem:[#allocation2 + $0x300] sm:$0xff] %v1020
    %1180 = vst [vmem:[#allocation2 + $0x308] sm:$0xff] %v1022
    %1181 = vst [vmem:[#allocation2 + $0x310] sm:$0xff] %v1024
    %1182 = vst [vmem:[#allocation2 + $0x318] sm:$0xff] %v1026
    %1183 = vst [vmem:[#allocation2 + $0x320] sm:$0xff] %v1028
    %1184 = vst [vmem:[#allocation2 + $0x328] sm:$0xff] %v1030
    %1185 = vst [vmem:[#allocation2 + $0x330] sm:$0xff] %v1032
    %1186 = vst [vmem:[#allocation2 + $0x338] sm:$0xff] %v1034
    %1187 = vst [vmem:[#allocation2 + $0x340] sm:$0xff] %v1036
    %1188 = vst [vmem:[#allocation2 + $0x348] sm:$0xff] %v1038
    %1189 = vst [vmem:[#allocation2 + $0x350] sm:$0xff] %v1040
    %1190 = vst [vmem:[#allocation2 + $0x358] sm:$0xff] %v1042
    %1191 = vst [vmem:[#allocation2 + $0x360] sm:$0xff] %v1044
    %1192 = vst [vmem:[#allocation2 + $0x368] sm:$0xff] %v1046
    %1193 = vst [vmem:[#allocation2 + $0x370] sm:$0xff] %v1048
    %1194 = vst [vmem:[#allocation2 + $0x378] sm:$0xff] %v1050
    %1195 = vst [vmem:[#allocation2 + $0x380] sm:$0xff] %v1052
    %1196 = vst [vmem:[#allocation2 + $0x388] sm:$0xff] %v1054
    %1197 = vst [vmem:[#allocation2 + $0x390] sm:$0xff] %v1056
    %1198 = vst [vmem:[#allocation2 + $0x398] sm:$0xff] %v1058
    %1199 = vst [vmem:[#allocation2 + $0x3a0] sm:$0xff] %v1060
    %1200 = vst [vmem:[#allocation2 + $0x3a8] sm:$0xff] %v1062
    %1201 = vst [vmem:[#allocation2 + $0x3b0] sm:$0xff] %v1064
    %1202 = vst [vmem:[#allocation2 + $0x3b8] sm:$0xff] %v1066
    %1203 = vst [vmem:[#allocation2 + $0x3c0] sm:$0xff] %v1068
    %1204 = vst [vmem:[#allocation2 + $0x3c8] sm:$0xff] %v1070
    %1205 = vst [vmem:[#allocation2 + $0x3d0] sm:$0xff] %v1072
    %1206 = vst [vmem:[#allocation2 + $0x3d8] sm:$0xff] %v1074
    %1207 = vst [vmem:[#allocation2 + $0x3e0] sm:$0xff] %v1076
    %1208 = vst [vmem:[#allocation2 + $0x3e8] sm:$0xff] %v1078
    %1209 = vst [vmem:[#allocation2 + $0x3f0] sm:$0xff] %v1080
    %1210 = vst [vmem:[#allocation2 + $0x3f8] sm:$0xff] %v1082
    // Predicated region
    $region14: #{tpu_custom_call.1} parent=1 // pred_check
      _
    $region15: #{tpu_custom_call.1} parent=1 // pred_check_branch
      %1212 = sbr.rel (0) target = $region17
    $region16: #{tpu_custom_call.1} parent=1 // pred_region
      %s1214 = ssub.s32 16384, 16384
      %1215 = vsyncadd [#allocation3], %s1214
      %s1216 = sshll.u32 [#allocation2], 4
      %s1217 = int_to_ptr.vmem [resolvable:$true] %s1216
      %1222 = dma.vmem_to_hbm [thread:$0]  %s1217, 16384, %s3, [#allocation3], 256, 256, 16
    $region17: #{tpu_custom_call.1} parent=1 // pred_fallthru
      _
    // Predicated region
    $region18: #{tpu_custom_call.1} parent=1 // pred_check
      _
    $region19: #{tpu_custom_call.1} parent=1 // pred_check_branch
      %1224 = sbr.rel (0) target = $region21
    $region20: #{tpu_custom_call.1} parent=1 // pred_region
      %1225 = dma.done [#allocation3], 16384
    $region21: #{tpu_custom_call.1} parent=1 // pred_fallthru
      _
    %1226 = vsyncpa [#allocation3], 1

</llo_original>
